<compile_context>
chip_gen: v7x
topology: tpu7x:2x2x1
jax: 0.10.0
libtpu: 0.0.40
codegen_flags: <defaults>
</compile_context>

<pallas_src>
import functools

import jax
import jax.numpy as jnp
from jax import lax
from jax.experimental import pallas as pl
from jax.experimental.pallas import tpu as pltpu

VMEM_LIMIT = 48 * 1024 * 1024   # safe on v7x (64 MiB phys); v6e/v5e can raise to ~110 MiB
EW_TILE = 512                   # ew output tile target (review: ~512 on v5e/v6e)


# ----------------------------------------------------------------------------
# Kernel 1: joint encoder + feature_decoder GCN stack (normalization folded in)
# ----------------------------------------------------------------------------
def _gcn_joint_kernel(a_ref, x2_ref, wj_ref, bj_ref, henc_ref, dec_ref,
                      *, num_layers, f):
    a = a_ref[...]                                          # [N, N] f32 (msg-passing adj)
    # gcn_norm: deg includes the +1.0 self-loop weight; dinv = D^-1/2 (inf -> 0).
    deg = jnp.sum(a, axis=1, keepdims=True) + 1.0           # [N, 1]
    dinv = jnp.where(deg > 0, lax.rsqrt(deg), 0.0)

    a_bf = a.astype(jnp.bfloat16)                           # bf16 MXU operand, f32 acc

    x2 = x2_ref[...]                                        # [N, J]: [x_enc | x_dec | 0]
    h = x2
    for layer in range(num_layers):                         # static unroll (L = 3)
        g = dinv * h                                        # D^-1/2 h
        ag = jnp.dot(a_bf, g.astype(jnp.bfloat16),
                     preferred_element_type=jnp.float32) + g        # (A + I) D^-1/2 h
        ah = dinv * ag                                      # == A_hat @ h (no A_hat built)
        h = jnp.dot(ah, wj_ref[layer],
                    preferred_element_type=jnp.float32) + bj_ref[layer]
        h = jnp.maximum(h, 0.0)                             # ReLU

    # Encoder slab (cols >= f zeroed) -> exact h_enc @ h_enc^T downstream.
    lane = lax.broadcasted_iota(jnp.int32, h.shape, 1)
    henc_ref[...] = jnp.where(lane < f, h, 0.0)
    # Residual feature decode: decoded = h_dec + x lives in cols [f, 2f);
    # emitted as a lane-dense [N, J] slab, sliced outside the kernel.
    dec_ref[...] = h + x2


# ----------------------------------------------------------------------------
# Kernel 2: edge weights, tiled over the [N, N] output, a_raw streamed per tile
# ----------------------------------------------------------------------------
def _edge_weight_kernel(hi_ref, hj_ref, a_raw_ref, ew_ref):
    s = lax.dot_general(hi_ref[...].astype(jnp.bfloat16),
                        hj_ref[...].astype(jnp.bfloat16),
                        dimension_numbers=(((1,), (1,)), ((), ())),
                        preferred_element_type=jnp.float32)
    # nan_to_num dropped: finite ReLU activations -> s is always finite.
    ew_ref[...] = jax.nn.sigmoid(s + a_raw_ref[...])


# ----------------------------------------------------------------------------
# Wrappers (glue: scatter / padding / packing stay in plain JAX)
# ----------------------------------------------------------------------------
def build_adjacencies(edge_list, edge_attr, n):
    """a_msg[t, s] = w  (GCNConv message passing);  a_raw[s, t] = w  (rebuild_adj_matrix)."""
    src, tgt = edge_list[0], edge_list[1]
    w = edge_attr.reshape(-1).astype(jnp.float32)
    a_msg = jnp.zeros((n, n), jnp.float32).at[tgt, src].add(w)
    a_raw = jnp.zeros((n, n), jnp.float32).at[src, tgt].set(w)
    return a_msg, a_raw


def _pack_joint_params(enc_w, enc_b, dec_w, dec_b, f, jdim):
    """Block-diagonal [jdim, jdim] weights (enc at [0:f,0:f], dec at [f:2f,f:2f])."""
    num_layers = len(enc_w)
    wj = jnp.zeros((num_layers, jdim, jdim), jnp.float32)
    bj = jnp.zeros((num_layers, 1, jdim), jnp.float32)
    for l in range(num_layers):
        wj = wj.at[l, :f, :f].set(enc_w[l])
        wj = wj.at[l, f:2 * f, f:2 * f].set(dec_w[l])
        bj = bj.at[l, 0, :f].set(enc_b[l].reshape(-1))
        bj = bj.at[l, 0, f:2 * f].set(dec_b[l].reshape(-1))
    return wj, bj


def _pick_tile(n, target):
    if n <= target:
        return n
    for t in (target, 256, 128, 64, 32, 16, 8):
        if n % t == 0:
            return t
    return n  # TODO(synk): ragged N needs masked edge tiles


def res_generator_forward(x, edge_list, edge_attr, params):
    n, f = x.shape
    num_layers = len(params["enc_w"])
    jdim = pl.cdiv(2 * f, 128) * 128             # lane-pad joint feature dim to 128
    # TODO(synk): for f >= 128 drop the block-diagonal packing and run two [f,f] stacks.

    a_msg, a_raw = build_adjacencies(edge_list, edge_attr, n)
    wj, bj = _pack_joint_params(params["enc_w"], params["enc_b"],
                                params["dec_w"], params["dec_b"], f, jdim)
    x2_pad = jnp.zeros((n, jdim), jnp.float32)
    x2_pad = x2_pad.at[:, :f].set(x).at[:, f:2 * f].set(x)

    # ---- kernel 1: GCN stacks (A, h fully VMEM-resident; normalization folded in)
    gcn_flops = num_layers * (2 * n * n * jdim + 2 * n * jdim * jdim)
    gcn_bytes = 4 * (n * n + 5 * n * jdim + num_layers * (jdim * jdim + jdim))
    h_enc_pad, dec_pad = pl.pallas_call(
        functools.partial(_gcn_joint_kernel, num_layers=num_layers, f=f),
        out_shape=(jax.ShapeDtypeStruct((n, jdim), jnp.float32),
                   jax.ShapeDtypeStruct((n, jdim), jnp.float32)),
        compiler_params=pltpu.CompilerParams(vmem_limit_bytes=VMEM_LIMIT),
        cost_estimate=pl.CostEstimate(flops=gcn_flops, transcendentals=n,
                                      bytes_accessed=gcn_bytes),
    )(a_msg, x2_pad, wj, bj)

    # ---- kernel 2: edge weights, (i, j)-tiled, both axes parallel (megacore / v7x)
    tm = _pick_tile(n, EW_TILE)
    tn = _pick_tile(n, EW_TILE)
    grid = (pl.cdiv(n, tm), pl.cdiv(n, tn))
    ew_flops = 2 * n * n * jdim + 4 * n * n
    ew_bytes = 4 * (2 * n * jdim + 2 * n * n)
    edge_weights = pl.pallas_call(
        _edge_weight_kernel,
        out_shape=jax.ShapeDtypeStruct((n, n), jnp.float32),
        grid=grid,
        in_specs=[pl.BlockSpec((tm, jdim), lambda i, j: (i, 0)),
                  pl.BlockSpec((tn, jdim), lambda i, j: (j, 0)),
                  pl.BlockSpec((tm, tn), lambda i, j: (i, j))],   # a_raw streamed w/ output
        out_specs=pl.BlockSpec((tm, tn), lambda i, j: (i, j)),
        compiler_params=pltpu.CompilerParams(
            dimension_semantics=("parallel", "parallel"),
            vmem_limit_bytes=VMEM_LIMIT),
        cost_estimate=pl.CostEstimate(flops=ew_flops, transcendentals=n * n,
                                      bytes_accessed=ew_bytes),
    )(h_enc_pad, h_enc_pad, a_raw)

    decoded = dec_pad[:, f:2 * f]                # residual feature decode (lane-dense slab sliced here)
    return decoded, edge_list, edge_weights


# ----------------------------------------------------------------------------
# Deterministic parameter init + example run
# ----------------------------------------------------------------------------
if __name__ == "__main__":
    N, F, E = 16, 8, 32        # nodes, node_features, edges
    NUM_LAYERS = 3             # num_conv_layers (conv_booster = 1)

    key = jax.random.PRNGKey(0)
    kx, ks, kt, kw, kp = jax.random.split(key, 5)

    x = jax.random.normal(kx, (N, F), jnp.float32)
    src = jax.random.randint(ks, (E,), 0, N)
    tgt = jax.random.randint(kt, (E,), 0, N)
    edge_list = jnp.stack([src, tgt])                                  # [2, E]
    edge_attr = jax.random.uniform(kw, (E,), jnp.float32, 0.1, 1.0)    # [E]

    # GCNConv weights (deterministic); all layers F -> F since conv_booster == 1
    # (encoder) and conv_booster**-1 == 1 (feature_decoder).
    wkeys = jax.random.split(kp, 2 * NUM_LAYERS)
    params = {
        "enc_w": [0.1 * jax.random.normal(wkeys[i], (F, F), jnp.float32)
                  for i in range(NUM_LAYERS)],
        "enc_b": [jnp.zeros((1, F), jnp.float32) for _ in range(NUM_LAYERS)],
        "dec_w": [0.1 * jax.random.normal(wkeys[NUM_LAYERS + i], (F, F), jnp.float32)
                  for i in range(NUM_LAYERS)],
        "dec_b": [jnp.zeros((1, F), jnp.float32) for _ in range(NUM_LAYERS)],
    }

    decoded, out_edges, edge_weights = jax.jit(res_generator_forward)(
        x, edge_list, edge_attr, params)
    jax.block_until_ready((decoded, out_edges, edge_weights))

    assert decoded.shape == (N, F)
    assert out_edges.shape == (2, E)
    assert edge_weights.shape == (N, N)
    assert bool(jnp.all(jnp.isfinite(decoded)))
    assert bool(jnp.all((edge_weights >= 0.0) & (edge_weights <= 1.0)))
    print("KERNEL_OK")
</pallas_src>

<mosaic_0001>
module attributes {stable_mosaic.version = 11 : i64} {
  func.func private @main(%arg0: i32) attributes {dimension_semantics = [#tpu.dimension_semantics<core_parallel>], iteration_bounds = array<i64: 2>, tpu.core_type = #tpu.core_type<sc_scalar_subcore>, window_params = []} {
    return
  }
}

module attributes {stable_mosaic.version = 11 : i64} {
  func.func private @main(%arg0: i32) attributes {dimension_semantics = [#tpu.dimension_semantics<core_parallel>], iteration_bounds = array<i64: 2>, tpu.core_type = #tpu.core_type<sc_scalar_subcore>, window_params = []} {
    return
  }
}

module attributes {stable_mosaic.version = 11 : i64} {
  func.func @_gcn_joint_kernel(%arg0: memref<16x16xf32, #tpu.memory_space<vmem>>, %arg1: memref<16x128xf32, #tpu.memory_space<vmem>>, %arg2: memref<3x128x128xf32, #tpu.memory_space<vmem>>, %arg3: memref<3x1x128xf32, #tpu.memory_space<vmem>>, %arg4: memref<16x128xf32, #tpu.memory_space<vmem>>, %arg5: memref<16x128xf32, #tpu.memory_space<vmem>>) attributes {dimension_semantics = [], scalar_prefetch = 0 : i64, scratch_operands = 0 : i64, tpu.core_type = #tpu.core_type<tc>} {
    %c0 = arith.constant 0 : index
    %c0_0 = arith.constant 0 : index
    %0 = vector.load %arg0[%c0, %c0_0] : memref<16x16xf32, #tpu.memory_space<vmem>>, vector<16x16xf32>
    %cst = arith.constant dense<0.000000e+00> : vector<16xf32>
    %1 = vector.multi_reduction <add>, %0, %cst [1] : vector<16x16xf32> to vector<16xf32>
    %2 = vector.shape_cast %1 : vector<16xf32> to vector<16x1xf32>
    %cst_1 = arith.constant 1.000000e+00 : f32
    %3 = vector.broadcast %cst_1 : f32 to vector<16x1xf32>
    %4 = arith.addf %2, %3 : vector<16x1xf32>
    %cst_2 = arith.constant 0.000000e+00 : f32
    %5 = vector.broadcast %cst_2 : f32 to vector<16x1xf32>
    %6 = arith.cmpf ogt, %4, %5 : vector<16x1xf32>
    %7 = math.rsqrt %4 : vector<16x1xf32>
    %cst_3 = arith.constant 0.000000e+00 : f32
    %8 = vector.broadcast %cst_3 : f32 to vector<16x1xf32>
    %9 = arith.select %6, %7, %8 : vector<16x1xi1>, vector<16x1xf32>
    %10 = arith.truncf %0 : vector<16x16xf32> to vector<16x16xbf16>
    %c0_4 = arith.constant 0 : index
    %c0_5 = arith.constant 0 : index
    %11 = vector.load %arg1[%c0_4, %c0_5] : memref<16x128xf32, #tpu.memory_space<vmem>>, vector<16x128xf32>
    %12 = vector.broadcast %9 : vector<16x1xf32> to vector<16x128xf32>
    %13 = arith.mulf %12, %11 : vector<16x128xf32>
    %14 = arith.truncf %13 : vector<16x128xf32> to vector<16x128xbf16>
    %cst_6 = arith.constant dense<0.000000e+00> : vector<16x128xf32>
    %15 = tpu.matmul %10, %14, %cst_6 {dimension_numbers = #tpu.dot_dimension_numbers<[1], [0], [0], [1], [0, 0, 1, 1], [], []>} : vector<16x16xbf16>, vector<16x128xbf16>, vector<16x128xf32> -> vector<16x128xf32>
    %16 = arith.addf %15, %13 : vector<16x128xf32>
    %17 = vector.broadcast %9 : vector<16x1xf32> to vector<16x128xf32>
    %18 = arith.mulf %17, %16 : vector<16x128xf32>
    %c0_7 = arith.constant 0 : index
    %c0_8 = arith.constant 0 : index
    %c0_9 = arith.constant 0 : index
    %19 = vector.load %arg2[%c0_7, %c0_8, %c0_9] : memref<3x128x128xf32, #tpu.memory_space<vmem>>, vector<1x128x128xf32>
    %20 = vector.shape_cast %19 : vector<1x128x128xf32> to vector<128x128xf32>
    %cst_10 = arith.constant dense<0.000000e+00> : vector<16x128xf32>
    %21 = tpu.matmul %18, %20, %cst_10 {dimension_numbers = #tpu.dot_dimension_numbers<[1], [0], [0], [1], [0, 0, 1, 1], [], []>} : vector<16x128xf32>, vector<128x128xf32>, vector<16x128xf32> -> vector<16x128xf32>
    %c0_11 = arith.constant 0 : index
    %c0_12 = arith.constant 0 : index
    %c0_13 = arith.constant 0 : index
    %22 = vector.load %arg3[%c0_11, %c0_12, %c0_13] : memref<3x1x128xf32, #tpu.memory_space<vmem>>, vector<1x1x128xf32>
    %23 = vector.shape_cast %22 : vector<1x1x128xf32> to vector<1x128xf32>
    %24 = vector.broadcast %23 : vector<1x128xf32> to vector<16x128xf32>
    %25 = arith.addf %21, %24 : vector<16x128xf32>
    %cst_14 = arith.constant 0.000000e+00 : f32
    %26 = vector.broadcast %cst_14 : f32 to vector<16x128xf32>
    %27 = arith.maximumf %25, %26 : vector<16x128xf32>
    %28 = vector.broadcast %9 : vector<16x1xf32> to vector<16x128xf32>
    %29 = arith.mulf %28, %27 : vector<16x128xf32>
    %30 = arith.truncf %29 : vector<16x128xf32> to vector<16x128xbf16>
    %cst_15 = arith.constant dense<0.000000e+00> : vector<16x128xf32>
    %31 = tpu.matmul %10, %30, %cst_15 {dimension_numbers = #tpu.dot_dimension_numbers<[1], [0], [0], [1], [0, 0, 1, 1], [], []>} : vector<16x16xbf16>, vector<16x128xbf16>, vector<16x128xf32> -> vector<16x128xf32>
    %32 = arith.addf %31, %29 : vector<16x128xf32>
    %33 = vector.broadcast %9 : vector<16x1xf32> to vector<16x128xf32>
    %34 = arith.mulf %33, %32 : vector<16x128xf32>
    %c1 = arith.constant 1 : index
    %c0_16 = arith.constant 0 : index
    %c0_17 = arith.constant 0 : index
    %35 = vector.load %arg2[%c1, %c0_16, %c0_17] : memref<3x128x128xf32, #tpu.memory_space<vmem>>, vector<1x128x128xf32>
    %36 = vector.shape_cast %35 : vector<1x128x128xf32> to vector<128x128xf32>
    %cst_18 = arith.constant dense<0.000000e+00> : vector<16x128xf32>
    %37 = tpu.matmul %34, %36, %cst_18 {dimension_numbers = #tpu.dot_dimension_numbers<[1], [0], [0], [1], [0, 0, 1, 1], [], []>} : vector<16x128xf32>, vector<128x128xf32>, vector<16x128xf32> -> vector<16x128xf32>
    %c1_19 = arith.constant 1 : index
    %c0_20 = arith.constant 0 : index
    %c0_21 = arith.constant 0 : index
    %38 = vector.load %arg3[%c1_19, %c0_20, %c0_21] : memref<3x1x128xf32, #tpu.memory_space<vmem>>, vector<1x1x128xf32>
    %39 = vector.shape_cast %38 : vector<1x1x128xf32> to vector<1x128xf32>
    %40 = vector.broadcast %39 : vector<1x128xf32> to vector<16x128xf32>
    %41 = arith.addf %37, %40 : vector<16x128xf32>
    %cst_22 = arith.constant 0.000000e+00 : f32
    %42 = vector.broadcast %cst_22 : f32 to vector<16x128xf32>
    %43 = arith.maximumf %41, %42 : vector<16x128xf32>
    %44 = vector.broadcast %9 : vector<16x1xf32> to vector<16x128xf32>
    %45 = arith.mulf %44, %43 : vector<16x128xf32>
    %46 = arith.truncf %45 : vector<16x128xf32> to vector<16x128xbf16>
    %cst_23 = arith.constant dense<0.000000e+00> : vector<16x128xf32>
    %47 = tpu.matmul %10, %46, %cst_23 {dimension_numbers = #tpu.dot_dimension_numbers<[1], [0], [0], [1], [0, 0, 1, 1], [], []>} : vector<16x16xbf16>, vector<16x128xbf16>, vector<16x128xf32> -> vector<16x128xf32>
    %48 = arith.addf %47, %45 : vector<16x128xf32>
    %49 = vector.broadcast %9 : vector<16x1xf32> to vector<16x128xf32>
    %50 = arith.mulf %49, %48 : vector<16x128xf32>
    %c2 = arith.constant 2 : index
    %c0_24 = arith.constant 0 : index
    %c0_25 = arith.constant 0 : index
    %51 = vector.load %arg2[%c2, %c0_24, %c0_25] : memref<3x128x128xf32, #tpu.memory_space<vmem>>, vector<1x128x128xf32>
    %52 = vector.shape_cast %51 : vector<1x128x128xf32> to vector<128x128xf32>
    %cst_26 = arith.constant dense<0.000000e+00> : vector<16x128xf32>
    %53 = tpu.matmul %50, %52, %cst_26 {dimension_numbers = #tpu.dot_dimension_numbers<[1], [0], [0], [1], [0, 0, 1, 1], [], []>} : vector<16x128xf32>, vector<128x128xf32>, vector<16x128xf32> -> vector<16x128xf32>
    %c2_27 = arith.constant 2 : index
    %c0_28 = arith.constant 0 : index
    %c0_29 = arith.constant 0 : index
    %54 = vector.load %arg3[%c2_27, %c0_28, %c0_29] : memref<3x1x128xf32, #tpu.memory_space<vmem>>, vector<1x1x128xf32>
    %55 = vector.shape_cast %54 : vector<1x1x128xf32> to vector<1x128xf32>
    %56 = vector.broadcast %55 : vector<1x128xf32> to vector<16x128xf32>
    %57 = arith.addf %53, %56 : vector<16x128xf32>
    %cst_30 = arith.constant 0.000000e+00 : f32
    %58 = vector.broadcast %cst_30 : f32 to vector<16x128xf32>
    %59 = arith.maximumf %57, %58 : vector<16x128xf32>
    %60 = tpu.iota {dimensions = array<i32: 1>} : vector<16x128xi32>
    %c8_i32 = arith.constant 8 : i32
    %61 = vector.broadcast %c8_i32 : i32 to vector<16x128xi32>
    %62 = arith.cmpi slt, %60, %61 : vector<16x128xi32>
    %cst_31 = arith.constant 0.000000e+00 : f32
    %63 = vector.broadcast %cst_31 : f32 to vector<16x128xf32>
    %64 = arith.select %62, %59, %63 : vector<16x128xi1>, vector<16x128xf32>
    %c0_32 = arith.constant 0 : index
    %c0_33 = arith.constant 0 : index
    %65 = vector.load %arg4[%c0_32, %c0_33] : memref<16x128xf32, #tpu.memory_space<vmem>>, vector<16x128xf32>
    tpu.vector_store %arg4[%c0_32, %c0_33], %64 {strides = array<i32>} : memref<16x128xf32, #tpu.memory_space<vmem>>, vector<16x128xf32>,
    %66 = arith.addf %59, %11 : vector<16x128xf32>
    %c0_34 = arith.constant 0 : index
    %c0_35 = arith.constant 0 : index
    %67 = vector.load %arg5[%c0_34, %c0_35] : memref<16x128xf32, #tpu.memory_space<vmem>>, vector<16x128xf32>
    tpu.vector_store %arg5[%c0_34, %c0_35], %66 {strides = array<i32>} : memref<16x128xf32, #tpu.memory_space<vmem>>, vector<16x128xf32>,
    return
  }
}

module attributes {stable_mosaic.version = 11 : i64} {
  func.func @_edge_weight_kernel(%arg0: i32, %arg1: i32, %arg2: memref<16x128xf32, #tpu.memory_space<vmem>>, %arg3: memref<16x128xf32, #tpu.memory_space<vmem>>, %arg4: memref<16x16xf32, #tpu.memory_space<vmem>>, %arg5: memref<16x16xf32, #tpu.memory_space<vmem>>) attributes {dimension_semantics = [#tpu.dimension_semantics<parallel>, #tpu.dimension_semantics<parallel>], iteration_bounds = array<i64: 1, 1>, scalar_prefetch = 0 : i64, scratch_operands = 0 : i64, tpu.core_type = #tpu.core_type<tc>, window_params = [{transform_indices = @transform_0, window_bounds = array<i64: 16, 128>}, {transform_indices = @transform_1, window_bounds = array<i64: 16, 128>}, {transform_indices = @transform_2, window_bounds = array<i64: 16, 16>}, {transform_indices = @transform_3, window_bounds = array<i64: 16, 16>}]} {
    %c0 = arith.constant 0 : index
    %c0_0 = arith.constant 0 : index
    %0 = vector.load %arg2[%c0, %c0_0] : memref<16x128xf32, #tpu.memory_space<vmem>>, vector<16x128xf32>
    %1 = arith.truncf %0 : vector<16x128xf32> to vector<16x128xbf16>
    %c0_1 = arith.constant 0 : index
    %c0_2 = arith.constant 0 : index
    %2 = vector.load %arg3[%c0_1, %c0_2] : memref<16x128xf32, #tpu.memory_space<vmem>>, vector<16x128xf32>
    %3 = arith.truncf %2 : vector<16x128xf32> to vector<16x128xbf16>
    %cst = arith.constant dense<0.000000e+00> : vector<16x16xf32>
    %4 = tpu.matmul %1, %3, %cst {dimension_numbers = #tpu.dot_dimension_numbers<[1], [1], [0], [0], [0, 0, 1, 0], [], []>} : vector<16x128xbf16>, vector<16x128xbf16>, vector<16x16xf32> -> vector<16x16xf32>
    %c0_3 = arith.constant 0 : index
    %c0_4 = arith.constant 0 : index
    %5 = vector.load %arg4[%c0_3, %c0_4] : memref<16x16xf32, #tpu.memory_space<vmem>>, vector<16x16xf32>
    %6 = arith.addf %4, %5 : vector<16x16xf32>
    %7 = arith.negf %6 : vector<16x16xf32>
    %8 = math.exp %7 : vector<16x16xf32>
    %cst_5 = arith.constant 1.000000e+00 : f32
    %9 = vector.broadcast %cst_5 : f32 to vector<16x16xf32>
    %10 = arith.addf %9, %8 : vector<16x16xf32>
    %11 = arith.divf %9, %10 : vector<16x16xf32>
    %c0_6 = arith.constant 0 : index
    %c0_7 = arith.constant 0 : index
    %12 = vector.load %arg5[%c0_6, %c0_7] : memref<16x16xf32, #tpu.memory_space<vmem>>, vector<16x16xf32>
    tpu.vector_store %arg5[%c0_6, %c0_7], %11 {strides = array<i32>} : memref<16x16xf32, #tpu.memory_space<vmem>>, vector<16x16xf32>,
    return
  }
  func.func @transform_0(%arg0: i32, %arg1: i32) -> (i32, i32) {
    %c0_i32 = arith.constant 0 : i32
    %c0_i32_0 = arith.constant 0 : i32
    return %arg0, %c0_i32 : i32, i32
  }
  func.func @transform_1(%arg0: i32, %arg1: i32) -> (i32, i32) {
    %c0_i32 = arith.constant 0 : i32
    %c0_i32_0 = arith.constant 0 : i32
    return %arg1, %c0_i32 : i32, i32
  }
  func.func @transform_2(%arg0: i32, %arg1: i32) -> (i32, i32) {
    %c0_i32 = arith.constant 0 : i32
    return %arg0, %arg1 : i32, i32
  }
  func.func @transform_3(%arg0: i32, %arg1: i32) -> (i32, i32) {
    %c0_i32 = arith.constant 0 : i32
    return %arg0, %arg1 : i32, i32
  }
}

</mosaic_0001>

<llo_original>
// kernel: res_generator_forward.2
$region0: #{res_generator_forward.2}
  #allocation0 [shape = 'u32[]', space=smem, size = 0x4, offset = 0x4, fixed_abs, tag = 'smem constant byte address 0x4 - core index']
  #allocation1 [shape = 'u32[144,128]{1,0:T(1,128)}', space=vmem, size = 0x12000, scoped, tag = 'internal scratch']
  %s0 = inlined_call_operand.hbm [shape: f32[16,16], index: 0, kind: input, shape index: {}]
  %s1 = inlined_call_operand.vmem [shape: f32[16,128], index: 1, kind: input, shape index: {}]
  %s2 = inlined_call_operand.vmem [shape: f32[3,128,128], index: 2, kind: input, shape index: {}]
  %s3 = inlined_call_operand.vmem [shape: f32[3,1,128], index: 3, kind: input, shape index: {}]
  %s4 = inlined_call_operand.vmem [shape: f32[16,128], index: 4, kind: output, shape index: {0}]
  %s5 = inlined_call_operand.vmem [shape: f32[16,128], index: 5, kind: output, shape index: {1}]
  %6 = xla_tuple %s4, %s5
  %s7 = sld [smem:[#allocation0]]
  $region38: #{res_generator_forward.2} parent=0
    _
  %s9 = ssub.s32 1, %s7
  %s10 = scalar_select 0, %s9, %s7
  $region1: #{res_generator_forward.2} parent=0
    #allocation2 [shape = 'u8[8192]{0}', space=vmem, size = 0x2000, scoped, tag = 'input window, operand 0, single buffered']
    #allocation3 [shape = 's32[1]{0}', space=sflag, size = 0x4, scoped, tag = 'scoped memory for res_generator_forward.2']
    %11 = vsyncpa [#allocation3], 0
    // Predicated region
    $region2: #{res_generator_forward.2} parent=1 // pred_check
      _
    $region3: #{res_generator_forward.2} parent=1 // pred_check_branch
      %13 = sbr.rel (0) target = $region5
    $region4: #{res_generator_forward.2} parent=1 // pred_region
      %s15 = ssub.s32 256, 256
      %16 = vsyncadd [#allocation3], %s15
      %s17 = sshll.u32 [#allocation2], 4
      %s18 = int_to_ptr.vmem [resolvable:$true] %s17
      %23 = dma.hbm_to_vmem [thread:$0]  %s0, 256, %s18, [#allocation3], 128, 128, 8
    $region5: #{res_generator_forward.2} parent=1 // pred_fallthru
      _
    // Predicated region
    $region6: #{res_generator_forward.2} parent=1 // pred_check
      _
    $region7: #{res_generator_forward.2} parent=1 // pred_check_branch
      %25 = sbr.rel (0) target = $region9
    $region8: #{res_generator_forward.2} parent=1 // pred_region
      _
    $region9: #{res_generator_forward.2} parent=1 // pred_fallthru
      _
    // Predicated region
    $region10: #{res_generator_forward.2} parent=1 // pred_check
      _
    $region11: #{res_generator_forward.2} parent=1 // pred_check_branch
      %27 = sbr.rel (0) target = $region13
    $region12: #{res_generator_forward.2} parent=1 // pred_region
      _
    $region13: #{res_generator_forward.2} parent=1 // pred_fallthru
      _
    // Predicated region
    $region14: #{res_generator_forward.2} parent=1 // pred_check
      _
    $region15: #{res_generator_forward.2} parent=1 // pred_check_branch
      %29 = sbr.rel (0) target = $region17
    $region16: #{res_generator_forward.2} parent=1 // pred_region
      _
    $region17: #{res_generator_forward.2} parent=1 // pred_fallthru
      _
    // Predicated region
    $region18: #{res_generator_forward.2} parent=1 // pred_check
      _
    $region19: #{res_generator_forward.2} parent=1 // pred_check_branch
      %31 = sbr.rel (0) target = $region21
    $region20: #{res_generator_forward.2} parent=1 // pred_region
      %32 = dma.done [#allocation3], 256
    $region21: #{res_generator_forward.2} parent=1 // pred_fallthru
      _
    %v34 = vld [vmem:[#allocation2] sm:$0xff]
    %v35 = vld [vmem:[#allocation2 + $0x8] sm:$0xff]
    %vm36 = vcmask 130048
    %v37 = vsel %vm36, %v34, 0.0
    %38 = vadd.xlane.f32.xlu0 %v37
    %v39 = vpop.xlane.xlu0 %38
    %v40 = vsel %vm36, %v35, 0.0
    %41 = vadd.xlane.f32.xlu0 %v40
    %v42 = vpop.xlane.xlu0 %41
    %v43 = vadd.f32 %v39, 1.0
    %v44 = vadd.f32 %v42, 1.0
    %vm45 = vcmp.gt.f32.partialorder %v43, 0.0
    %vm46 = vcmp.gt.f32.partialorder %v44, 0.0
    %v47 = vrsqrt.pop %v43
    %v48 = vrsqrt.pop %v44
    %v49 = vsel %vm45, %v47, 0.0
    %v50 = vsel %vm46, %v48, 0.0
    %v51 = vpack.c.bf16 %v35, %v34
    %v52 = vld [vmem:[%s1] sm:$0xff]
    %v53 = vld [vmem:[%s1 + $0x8] sm:$0xff]
    %v54 = vmul.f32 %v49, %v52
    %v55 = vmul.f32 %v50, %v53
    %v56 = vpack.c.bf16 %v55, %v54
    %v58 = vsel %vm36, %v51, 0
    %60 = vmatprep.subr.bf16.mxu0 0
    %61 = vmatpush1.bf16.msra.mxu0 %v56
    %62 = vmatprep.subr.bf16.mxu0 0
    %63 = vmatpush1.bf16.msra.mxu0 0
    %64 = vmatprep.subr.bf16.mxu0 0
    %65 = vmatpush1.bf16.msra.mxu0 0
    %66 = vmatprep.subr.bf16.mxu0 0
    %67 = vmatpush1.bf16.msra.mxu0 0
    %68 = vmatprep.subr.bf16.mxu0 0
    %69 = vmatpush1.bf16.msra.mxu0 0
    %70 = vmatprep.subr.bf16.mxu0 0
    %71 = vmatpush1.bf16.msra.mxu0 0
    %72 = vmatprep.subr.bf16.mxu0 0
    %73 = vmatpush1.bf16.msra.mxu0 0
    %74 = vmatprep.subr.bf16.mxu0 0
    %75 = vmatpush1.bf16.msra.mxu0 0
    %76 = vmatprep.subr.bf16.mxu0 0
    %77 = vmatpush1.bf16.msra.mxu0 0
    %78 = vmatprep.subr.bf16.mxu0 0
    %79 = vmatpush1.bf16.msra.mxu0 0
    %80 = vmatprep.subr.bf16.mxu0 0
    %81 = vmatpush1.bf16.msra.mxu0 0
    %82 = vmatprep.subr.bf16.mxu0 0
    %83 = vmatpush1.bf16.msra.mxu0 0
    %84 = vmatprep.subr.bf16.mxu0 0
    %85 = vmatpush1.bf16.msra.mxu0 0
    %86 = vmatprep.subr.bf16.mxu0 0
    %87 = vmatpush1.bf16.msra.mxu0 0
    %88 = vmatprep.subr.bf16.mxu0 0
    %89 = vmatpush1.bf16.msra.mxu0 0
    %90 = vmatprep.subr.bf16.mxu0 0
    %91 = vmatpush1.bf16.msra.mxu0 0
    %92 = vmatprep.mubr.bf16.mxu0 0
    %93 = vmatmul.mubr.bf16.gmra.mrb[0].mxu0 %v58
    %v94 = vpop.f32.mrb[0].mxu0
    %v95 = vadd.f32 %v54, %v94
    %v96 = vpop.f32.mrb[0].mxu0
    %v97 = vpop.f32.mrb[0].mxu0
    %v98 = vadd.f32 %v55, %v97
    %v99 = vpop.f32.mrb[0].mxu0
    %100 = vdwg.mxu0
    %v101 = vmul.f32 %v49, %v95
    %v102 = vmul.f32 %v50, %v98
    %v103 = vld [vmem:[%s2] sm:$0xff]
    %v104 = vld [vmem:[%s2 + $0x8] sm:$0xff]
    %v105 = vld [vmem:[%s2 + $0x10] sm:$0xff]
    %v106 = vld [vmem:[%s2 + $0x18] sm:$0xff]
    %v107 = vld [vmem:[%s2 + $0x20] sm:$0xff]
    %v108 = vld [vmem:[%s2 + $0x28] sm:$0xff]
    %v109 = vld [vmem:[%s2 + $0x30] sm:$0xff]
    %v110 = vld [vmem:[%s2 + $0x38] sm:$0xff]
    %v111 = vld [vmem:[%s2 + $0x40] sm:$0xff]
    %v112 = vld [vmem:[%s2 + $0x48] sm:$0xff]
    %v113 = vld [vmem:[%s2 + $0x50] sm:$0xff]
    %v114 = vld [vmem:[%s2 + $0x58] sm:$0xff]
    %v115 = vld [vmem:[%s2 + $0x60] sm:$0xff]
    %v116 = vld [vmem:[%s2 + $0x68] sm:$0xff]
    %v117 = vld [vmem:[%s2 + $0x70] sm:$0xff]
    %v118 = vld [vmem:[%s2 + $0x78] sm:$0xff]
    %v119 = vld [vmem:[%s3] sm:$0x1]
    %v121 = vlaneseq
    %v122 = vshrl.u32 %v121, 7
    %v123 = vsub.s32 0, %v122
    %v124 = vrot.slane %v119, %v123
    %126 = vmatprep.subr.mxu0 0.0
    %127 = vmatpush1.msra.mxu0 %v103
    %128 = vmatprep.subr.mxu0 0.0
    %129 = vmatpush1.msra.mxu0 %v104
    %130 = vmatprep.subr.mxu0 0.0
    %131 = vmatpush1.msra.mxu0 %v105
    %132 = vmatprep.subr.mxu0 0.0
    %133 = vmatpush1.msra.mxu0 %v106
    %134 = vmatprep.subr.mxu0 0.0
    %135 = vmatpush1.msra.mxu0 %v107
    %136 = vmatprep.subr.mxu0 0.0
    %137 = vmatpush1.msra.mxu0 %v108
    %138 = vmatprep.subr.mxu0 0.0
    %139 = vmatpush1.msra.mxu0 %v109
    %140 = vmatprep.subr.mxu0 0.0
    %141 = vmatpush1.msra.mxu0 %v110
    %142 = vmatprep.subr.mxu0 0.0
    %143 = vmatpush1.msra.mxu0 %v111
    %144 = vmatprep.subr.mxu0 0.0
    %145 = vmatpush1.msra.mxu0 %v112
    %146 = vmatprep.subr.mxu0 0.0
    %147 = vmatpush1.msra.mxu0 %v113
    %148 = vmatprep.subr.mxu0 0.0
    %149 = vmatpush1.msra.mxu0 %v114
    %150 = vmatprep.subr.mxu0 0.0
    %151 = vmatpush1.msra.mxu0 %v115
    %152 = vmatprep.subr.mxu0 0.0
    %153 = vmatpush1.msra.mxu0 %v116
    %154 = vmatprep.subr.mxu0 0.0
    %155 = vmatpush1.msra.mxu0 %v117
    %156 = vmatprep.subr.mxu0 0.0
    %157 = vmatpush1.msra.mxu0 %v118
    %158 = vmatprep.subr.mxu0 0.0
    %159 = vmatpush1.msra.mxu0 0.0
    %160 = vmatprep.subr.mxu0 0.0
    %161 = vmatpush1.msra.mxu0 0.0
    %162 = vmatprep.subr.mxu0 0.0
    %163 = vmatpush1.msra.mxu0 0.0
    %164 = vmatprep.subr.mxu0 0.0
    %165 = vmatpush1.msra.mxu0 0.0
    %166 = vmatprep.subr.mxu0 0.0
    %167 = vmatpush1.msra.mxu0 0.0
    %168 = vmatprep.subr.mxu0 0.0
    %169 = vmatpush1.msra.mxu0 0.0
    %170 = vmatprep.subr.mxu0 0.0
    %171 = vmatpush1.msra.mxu0 0.0
    %172 = vmatprep.subr.mxu0 0.0
    %173 = vmatpush1.msra.mxu0 0.0
    %174 = vmatprep.subr.mxu0 0.0
    %175 = vmatpush1.msra.mxu0 0.0
    %176 = vmatprep.subr.mxu0 0.0
    %177 = vmatpush1.msra.mxu0 0.0
    %178 = vmatprep.subr.mxu0 0.0
    %179 = vmatpush1.msra.mxu0 0.0
    %180 = vmatprep.subr.mxu0 0.0
    %181 = vmatpush1.msra.mxu0 0.0
    %182 = vmatprep.subr.mxu0 0.0
    %183 = vmatpush1.msra.mxu0 0.0
    %184 = vmatprep.subr.mxu0 0.0
    %185 = vmatpush1.msra.mxu0 0.0
    %186 = vmatprep.subr.mxu0 0.0
    %187 = vmatpush1.msra.mxu0 0.0
    %188 = vmatprep.subr.mxu0 0.0
    %189 = vmatpush1.msra.mxu0 0.0
    %190 = vmatprep.mubr.f32.mxu0 0.0
    %191 = vmatmul.mubr.f32.gmra.mrb[0].mxu0 %v101
    %v192 = vpop.f32.mrb[0].mxu0
    %v193 = vadd.f32 %v124, %v192
    %v194 = vpop.f32.mrb[0].mxu0
    %195 = vmatprep.mubr.f32.mxu0 0.0
    %196 = vmatmul.mubr.f32.gmra.mrb[0].mxu0 %v102
    %v197 = vpop.f32.mrb[0].mxu0
    %v198 = vadd.f32 %v124, %v197
    %v199 = vpop.f32.mrb[0].mxu0
    %200 = vdwg.mxu0
    %v201 = vmax.f32 %v193, 0.0
    %v202 = vmax.f32 %v198, 0.0
    %v203 = vmul.f32 %v49, %v201
    %v204 = vmul.f32 %v50, %v202
    %v205 = vpack.c.bf16 %v204, %v203
    %206 = vmatprep.subr.bf16.mxu0 0
    %207 = vmatpush1.bf16.msra.mxu0 %v205
    %208 = vmatprep.subr.bf16.mxu0 0
    %209 = vmatpush1.bf16.msra.mxu0 0
    %210 = vmatprep.subr.bf16.mxu0 0
    %211 = vmatpush1.bf16.msra.mxu0 0
    %212 = vmatprep.subr.bf16.mxu0 0
    %213 = vmatpush1.bf16.msra.mxu0 0
    %214 = vmatprep.subr.bf16.mxu0 0
    %215 = vmatpush1.bf16.msra.mxu0 0
    %216 = vmatprep.subr.bf16.mxu0 0
    %217 = vmatpush1.bf16.msra.mxu0 0
    %218 = vmatprep.subr.bf16.mxu0 0
    %219 = vmatpush1.bf16.msra.mxu0 0
    %220 = vmatprep.subr.bf16.mxu0 0
    %221 = vmatpush1.bf16.msra.mxu0 0
    %222 = vmatprep.subr.bf16.mxu0 0
    %223 = vmatpush1.bf16.msra.mxu0 0
    %224 = vmatprep.subr.bf16.mxu0 0
    %225 = vmatpush1.bf16.msra.mxu0 0
    %226 = vmatprep.subr.bf16.mxu0 0
    %227 = vmatpush1.bf16.msra.mxu0 0
    %228 = vmatprep.subr.bf16.mxu0 0
    %229 = vmatpush1.bf16.msra.mxu0 0
    %230 = vmatprep.subr.bf16.mxu0 0
    %231 = vmatpush1.bf16.msra.mxu0 0
    %232 = vmatprep.subr.bf16.mxu0 0
    %233 = vmatpush1.bf16.msra.mxu0 0
    %234 = vmatprep.subr.bf16.mxu0 0
    %235 = vmatpush1.bf16.msra.mxu0 0
    %236 = vmatprep.subr.bf16.mxu0 0
    %237 = vmatpush1.bf16.msra.mxu0 0
    %238 = vmatprep.mubr.bf16.mxu0 0
    %239 = vmatmul.mubr.bf16.gmra.mrb[0].mxu0 %v58
    %v240 = vpop.f32.mrb[0].mxu0
    %v241 = vadd.f32 %v203, %v240
    %v242 = vpop.f32.mrb[0].mxu0
    %v243 = vpop.f32.mrb[0].mxu0
    %v244 = vadd.f32 %v204, %v243
    %v245 = vpop.f32.mrb[0].mxu0
    %246 = vdwg.mxu0
    %v247 = vmul.f32 %v49, %v241
    %v248 = vmul.f32 %v50, %v244
    %s249 = scalar_lea.vmem %s2, 128
    %v250 = vld [vmem:[%s249] sm:$0xff]
    %v251 = vld [vmem:[%s249 + $0x8] sm:$0xff]
    %v252 = vld [vmem:[%s249 + $0x10] sm:$0xff]
    %v253 = vld [vmem:[%s249 + $0x18] sm:$0xff]
    %v254 = vld [vmem:[%s249 + $0x20] sm:$0xff]
    %v255 = vld [vmem:[%s249 + $0x28] sm:$0xff]
    %v256 = vld [vmem:[%s249 + $0x30] sm:$0xff]
    %v257 = vld [vmem:[%s249 + $0x38] sm:$0xff]
    %v258 = vld [vmem:[%s249 + $0x40] sm:$0xff]
    %v259 = vld [vmem:[%s249 + $0x48] sm:$0xff]
    %v260 = vld [vmem:[%s249 + $0x50] sm:$0xff]
    %v261 = vld [vmem:[%s249 + $0x58] sm:$0xff]
    %v262 = vld [vmem:[%s249 + $0x60] sm:$0xff]
    %v263 = vld [vmem:[%s249 + $0x68] sm:$0xff]
    %v264 = vld [vmem:[%s249 + $0x70] sm:$0xff]
    %v265 = vld [vmem:[%s249 + $0x78] sm:$0xff]
    %s266 = scalar_lea.vmem %s3, 1
    %v267 = vld [vmem:[%s266] sm:$0x1]
    %v269 = vlaneseq
    %v270 = vshrl.u32 %v269, 7
    %v271 = vsub.s32 0, %v270
    %v272 = vrot.slane %v267, %v271
    %274 = vmatprep.subr.mxu0 0.0
    %275 = vmatpush1.msra.mxu0 %v250
    %276 = vmatprep.subr.mxu0 0.0
    %277 = vmatpush1.msra.mxu0 %v251
    %278 = vmatprep.subr.mxu0 0.0
    %279 = vmatpush1.msra.mxu0 %v252
    %280 = vmatprep.subr.mxu0 0.0
    %281 = vmatpush1.msra.mxu0 %v253
    %282 = vmatprep.subr.mxu0 0.0
    %283 = vmatpush1.msra.mxu0 %v254
    %284 = vmatprep.subr.mxu0 0.0
    %285 = vmatpush1.msra.mxu0 %v255
    %286 = vmatprep.subr.mxu0 0.0
    %287 = vmatpush1.msra.mxu0 %v256
    %288 = vmatprep.subr.mxu0 0.0
    %289 = vmatpush1.msra.mxu0 %v257
    %290 = vmatprep.subr.mxu0 0.0
    %291 = vmatpush1.msra.mxu0 %v258
    %292 = vmatprep.subr.mxu0 0.0
    %293 = vmatpush1.msra.mxu0 %v259
    %294 = vmatprep.subr.mxu0 0.0
    %295 = vmatpush1.msra.mxu0 %v260
    %296 = vmatprep.subr.mxu0 0.0
    %297 = vmatpush1.msra.mxu0 %v261
    %298 = vmatprep.subr.mxu0 0.0
    %299 = vmatpush1.msra.mxu0 %v262
    %300 = vmatprep.subr.mxu0 0.0
    %301 = vmatpush1.msra.mxu0 %v263
    %302 = vmatprep.subr.mxu0 0.0
    %303 = vmatpush1.msra.mxu0 %v264
    %304 = vmatprep.subr.mxu0 0.0
    %305 = vmatpush1.msra.mxu0 %v265
    %306 = vmatprep.subr.mxu0 0.0
    %307 = vmatpush1.msra.mxu0 0.0
    %308 = vmatprep.subr.mxu0 0.0
    %309 = vmatpush1.msra.mxu0 0.0
    %310 = vmatprep.subr.mxu0 0.0
    %311 = vmatpush1.msra.mxu0 0.0
    %312 = vmatprep.subr.mxu0 0.0
    %313 = vmatpush1.msra.mxu0 0.0
    %314 = vmatprep.subr.mxu0 0.0
    %315 = vmatpush1.msra.mxu0 0.0
    %316 = vmatprep.subr.mxu0 0.0
    %317 = vmatpush1.msra.mxu0 0.0
    %318 = vmatprep.subr.mxu0 0.0
    %319 = vmatpush1.msra.mxu0 0.0
    %320 = vmatprep.subr.mxu0 0.0
    %321 = vmatpush1.msra.mxu0 0.0
    %322 = vmatprep.subr.mxu0 0.0
    %323 = vmatpush1.msra.mxu0 0.0
    %324 = vmatprep.subr.mxu0 0.0
    %325 = vmatpush1.msra.mxu0 0.0
    %326 = vmatprep.subr.mxu0 0.0
    %327 = vmatpush1.msra.mxu0 0.0
    %328 = vmatprep.subr.mxu0 0.0
    %329 = vmatpush1.msra.mxu0 0.0
    %330 = vmatprep.subr.mxu0 0.0
    %331 = vmatpush1.msra.mxu0 0.0
    %332 = vmatprep.subr.mxu0 0.0
    %333 = vmatpush1.msra.mxu0 0.0
    %334 = vmatprep.subr.mxu0 0.0
    %335 = vmatpush1.msra.mxu0 0.0
    %336 = vmatprep.subr.mxu0 0.0
    %337 = vmatpush1.msra.mxu0 0.0
    %338 = vmatprep.mubr.f32.mxu0 0.0
    %339 = vmatmul.mubr.f32.gmra.mrb[0].mxu0 %v247
    %v340 = vpop.f32.mrb[0].mxu0
    %v341 = vadd.f32 %v272, %v340
    %v342 = vpop.f32.mrb[0].mxu0
    %343 = vmatprep.mubr.f32.mxu0 0.0
    %344 = vmatmul.mubr.f32.gmra.mrb[0].mxu0 %v248
    %v345 = vpop.f32.mrb[0].mxu0
    %v346 = vadd.f32 %v272, %v345
    %v347 = vpop.f32.mrb[0].mxu0
    %348 = vdwg.mxu0
    %v349 = vmax.f32 %v341, 0.0
    %v350 = vmax.f32 %v346, 0.0
    %v351 = vmul.f32 %v49, %v349
    %v352 = vmul.f32 %v50, %v350
    %v353 = vpack.c.bf16 %v352, %v351
    %354 = vmatprep.subr.bf16.mxu0 0
    %355 = vmatpush1.bf16.msra.mxu0 %v353
    %356 = vmatprep.subr.bf16.mxu0 0
    %357 = vmatpush1.bf16.msra.mxu0 0
    %358 = vmatprep.subr.bf16.mxu0 0
    %359 = vmatpush1.bf16.msra.mxu0 0
    %360 = vmatprep.subr.bf16.mxu0 0
    %361 = vmatpush1.bf16.msra.mxu0 0
    %362 = vmatprep.subr.bf16.mxu0 0
    %363 = vmatpush1.bf16.msra.mxu0 0
    %364 = vmatprep.subr.bf16.mxu0 0
    %365 = vmatpush1.bf16.msra.mxu0 0
    %366 = vmatprep.subr.bf16.mxu0 0
    %367 = vmatpush1.bf16.msra.mxu0 0
    %368 = vmatprep.subr.bf16.mxu0 0
    %369 = vmatpush1.bf16.msra.mxu0 0
    %370 = vmatprep.subr.bf16.mxu0 0
    %371 = vmatpush1.bf16.msra.mxu0 0
    %372 = vmatprep.subr.bf16.mxu0 0
    %373 = vmatpush1.bf16.msra.mxu0 0
    %374 = vmatprep.subr.bf16.mxu0 0
    %375 = vmatpush1.bf16.msra.mxu0 0
    %376 = vmatprep.subr.bf16.mxu0 0
    %377 = vmatpush1.bf16.msra.mxu0 0
    %378 = vmatprep.subr.bf16.mxu0 0
    %379 = vmatpush1.bf16.msra.mxu0 0
    %380 = vmatprep.subr.bf16.mxu0 0
    %381 = vmatpush1.bf16.msra.mxu0 0
    %382 = vmatprep.subr.bf16.mxu0 0
    %383 = vmatpush1.bf16.msra.mxu0 0
    %384 = vmatprep.subr.bf16.mxu0 0
    %385 = vmatpush1.bf16.msra.mxu0 0
    %386 = vmatprep.mubr.bf16.mxu0 0
    %387 = vmatmul.mubr.bf16.gmra.mrb[0].mxu0 %v58
    %v388 = vpop.f32.mrb[0].mxu0
    %v389 = vadd.f32 %v351, %v388
    %v390 = vpop.f32.mrb[0].mxu0
    %v391 = vpop.f32.mrb[0].mxu0
    %v392 = vadd.f32 %v352, %v391
    %v393 = vpop.f32.mrb[0].mxu0
    %394 = vdwg.mxu0
    %v395 = vmul.f32 %v49, %v389
    %v396 = vmul.f32 %v50, %v392
    %s397 = scalar_lea.vmem %s2, 256
    %v398 = vld [vmem:[%s397] sm:$0xff]
    %v399 = vld [vmem:[%s397 + $0x8] sm:$0xff]
    %v400 = vld [vmem:[%s397 + $0x10] sm:$0xff]
    %v401 = vld [vmem:[%s397 + $0x18] sm:$0xff]
    %v402 = vld [vmem:[%s397 + $0x20] sm:$0xff]
    %v403 = vld [vmem:[%s397 + $0x28] sm:$0xff]
    %v404 = vld [vmem:[%s397 + $0x30] sm:$0xff]
    %v405 = vld [vmem:[%s397 + $0x38] sm:$0xff]
    %v406 = vld [vmem:[%s397 + $0x40] sm:$0xff]
    %v407 = vld [vmem:[%s397 + $0x48] sm:$0xff]
    %v408 = vld [vmem:[%s397 + $0x50] sm:$0xff]
    %v409 = vld [vmem:[%s397 + $0x58] sm:$0xff]
    %v410 = vld [vmem:[%s397 + $0x60] sm:$0xff]
    %v411 = vld [vmem:[%s397 + $0x68] sm:$0xff]
    %v412 = vld [vmem:[%s397 + $0x70] sm:$0xff]
    %v413 = vld [vmem:[%s397 + $0x78] sm:$0xff]
    %s414 = scalar_lea.vmem %s3, 2
    %v415 = vld [vmem:[%s414] sm:$0x1]
    %v417 = vlaneseq
    %v418 = vshrl.u32 %v417, 7
    %v419 = vsub.s32 0, %v418
    %v420 = vrot.slane %v415, %v419
    %422 = vmatprep.subr.mxu0 0.0
    %423 = vmatpush1.msra.mxu0 %v398
    %424 = vmatprep.subr.mxu0 0.0
    %425 = vmatpush1.msra.mxu0 %v399
    %426 = vmatprep.subr.mxu0 0.0
    %427 = vmatpush1.msra.mxu0 %v400
    %428 = vmatprep.subr.mxu0 0.0
    %429 = vmatpush1.msra.mxu0 %v401
    %430 = vmatprep.subr.mxu0 0.0
    %431 = vmatpush1.msra.mxu0 %v402
    %432 = vmatprep.subr.mxu0 0.0
    %433 = vmatpush1.msra.mxu0 %v403
    %434 = vmatprep.subr.mxu0 0.0
    %435 = vmatpush1.msra.mxu0 %v404
    %436 = vmatprep.subr.mxu0 0.0
    %437 = vmatpush1.msra.mxu0 %v405
    %438 = vmatprep.subr.mxu0 0.0
    %439 = vmatpush1.msra.mxu0 %v406
    %440 = vmatprep.subr.mxu0 0.0
    %441 = vmatpush1.msra.mxu0 %v407
    %442 = vmatprep.subr.mxu0 0.0
    %443 = vmatpush1.msra.mxu0 %v408
    %444 = vmatprep.subr.mxu0 0.0
    %445 = vmatpush1.msra.mxu0 %v409
    %446 = vmatprep.subr.mxu0 0.0
    %447 = vmatpush1.msra.mxu0 %v410
    %448 = vmatprep.subr.mxu0 0.0
    %449 = vmatpush1.msra.mxu0 %v411
    %450 = vmatprep.subr.mxu0 0.0
    %451 = vmatpush1.msra.mxu0 %v412
    %452 = vmatprep.subr.mxu0 0.0
    %453 = vmatpush1.msra.mxu0 %v413
    %454 = vmatprep.subr.mxu0 0.0
    %455 = vmatpush1.msra.mxu0 0.0
    %456 = vmatprep.subr.mxu0 0.0
    %457 = vmatpush1.msra.mxu0 0.0
    %458 = vmatprep.subr.mxu0 0.0
    %459 = vmatpush1.msra.mxu0 0.0
    %460 = vmatprep.subr.mxu0 0.0
    %461 = vmatpush1.msra.mxu0 0.0
    %462 = vmatprep.subr.mxu0 0.0
    %463 = vmatpush1.msra.mxu0 0.0
    %464 = vmatprep.subr.mxu0 0.0
    %465 = vmatpush1.msra.mxu0 0.0
    %466 = vmatprep.subr.mxu0 0.0
    %467 = vmatpush1.msra.mxu0 0.0
    %468 = vmatprep.subr.mxu0 0.0
    %469 = vmatpush1.msra.mxu0 0.0
    %470 = vmatprep.subr.mxu0 0.0
    %471 = vmatpush1.msra.mxu0 0.0
    %472 = vmatprep.subr.mxu0 0.0
    %473 = vmatpush1.msra.mxu0 0.0
    %474 = vmatprep.subr.mxu0 0.0
    %475 = vmatpush1.msra.mxu0 0.0
    %476 = vmatprep.subr.mxu0 0.0
    %477 = vmatpush1.msra.mxu0 0.0
    %478 = vmatprep.subr.mxu0 0.0
    %479 = vmatpush1.msra.mxu0 0.0
    %480 = vmatprep.subr.mxu0 0.0
    %481 = vmatpush1.msra.mxu0 0.0
    %482 = vmatprep.subr.mxu0 0.0
    %483 = vmatpush1.msra.mxu0 0.0
    %484 = vmatprep.subr.mxu0 0.0
    %485 = vmatpush1.msra.mxu0 0.0
    %486 = vmatprep.mubr.f32.mxu0 0.0
    %487 = vmatmul.mubr.f32.gmra.mrb[0].mxu0 %v395
    %v488 = vpop.f32.mrb[0].mxu0
    %v489 = vadd.f32 %v420, %v488
    %v490 = vpop.f32.mrb[0].mxu0
    %491 = vmatprep.mubr.f32.mxu0 0.0
    %492 = vmatmul.mubr.f32.gmra.mrb[0].mxu0 %v396
    %v493 = vpop.f32.mrb[0].mxu0
    %v494 = vadd.f32 %v420, %v493
    %v495 = vpop.f32.mrb[0].mxu0
    %496 = vdwg.mxu0
    %v497 = vmax.f32 %v489, 0.0
    %v498 = vmax.f32 %v494, 0.0
    %v499 = vlaneseq
    %v500 = vand.u32 %v499, 127
    %vm501 = vcmp.lt.s32.totalorder %v500, 8
    %v502 = vsel %vm501, %v497, 0.0
    %v503 = vsel %vm501, %v498, 0.0
    %504 = vst [vmem:[%s4] sm:$0xff] %v502
    %505 = vst [vmem:[%s4 + $0x8] sm:$0xff] %v503
    %v506 = vadd.f32 %v497, %v52
    %v507 = vadd.f32 %v498, %v53
    %508 = vst [vmem:[%s5] sm:$0xff] %v506
    %509 = vst [vmem:[%s5 + $0x8] sm:$0xff] %v507
    // Predicated region
    $region22: #{res_generator_forward.2} parent=1 // pred_check
      _
    $region23: #{res_generator_forward.2} parent=1 // pred_check_branch
      %511 = sbr.rel (0) target = $region25
    $region24: #{res_generator_forward.2} parent=1 // pred_region
      _
    $region25: #{res_generator_forward.2} parent=1 // pred_fallthru
      _
    // Predicated region
    $region26: #{res_generator_forward.2} parent=1 // pred_check
      _
    $region27: #{res_generator_forward.2} parent=1 // pred_check_branch
      %513 = sbr.rel (0) target = $region29
    $region28: #{res_generator_forward.2} parent=1 // pred_region
      _
    $region29: #{res_generator_forward.2} parent=1 // pred_fallthru
      _
    // Predicated region
    $region30: #{res_generator_forward.2} parent=1 // pred_check
      _
    $region31: #{res_generator_forward.2} parent=1 // pred_check_branch
      %515 = sbr.rel (0) target = $region33
    $region32: #{res_generator_forward.2} parent=1 // pred_region
      _
    $region33: #{res_generator_forward.2} parent=1 // pred_fallthru
      _
    // Predicated region
    $region34: #{res_generator_forward.2} parent=1 // pred_check
      _
    $region35: #{res_generator_forward.2} parent=1 // pred_check_branch
      %517 = sbr.rel (0) target = $region37
    $region36: #{res_generator_forward.2} parent=1 // pred_region
      _
    $region37: #{res_generator_forward.2} parent=1 // pred_fallthru
      _
    %518 = vsyncpa [#allocation3], 1

// kernel: res_generator_forward.3
$region0: #{res_generator_forward.3}
  #allocation0 [shape = 'u32[]', space=smem, size = 0x4, offset = 0x4, fixed_abs, tag = 'smem constant byte address 0x4 - core index']
  #allocation1 [shape = 'u32[144,128]{1,0:T(1,128)}', space=vmem, size = 0x12000, scoped, tag = 'internal scratch']
  %s0 = inlined_call_operand.vmem [shape: f32[16,128], index: 0, kind: input, shape index: {}, may-alias: {0,1}]
  %s1 = inlined_call_operand.vmem [shape: f32[16,128], index: 1, kind: input, shape index: {}, may-alias: {0,1}]
  %s2 = inlined_call_operand.vmem [shape: f32[16,16], index: 2, kind: input, shape index: {}]
  %s3 = inlined_call_operand.hbm [shape: f32[16,16], index: 3, kind: output, shape index: {}]
  %s4 = sld [smem:[#allocation0]]
  $region22: #{res_generator_forward.3} parent=0
    _
  %s6 = ssub.s32 1, %s4
  %s7 = scalar_select 0, %s6, %s4
  $region1: #{res_generator_forward.3} parent=0
    #allocation2 [shape = 'u8[8192]{0}', space=vmem, size = 0x2000, scoped, tag = 'output window, operand 0, single buffered']
    #allocation3 [shape = 's32[1]{0}', space=sflag, size = 0x4, scoped, tag = 'scoped memory for res_generator_forward.3']
    %8 = vsyncpa [#allocation3], 0
    // Predicated region
    $region2: #{res_generator_forward.3} parent=1 // pred_check
      _
    $region3: #{res_generator_forward.3} parent=1 // pred_check_branch
      %10 = sbr.rel (0) target = $region5
    $region4: #{res_generator_forward.3} parent=1 // pred_region
      _
    $region5: #{res_generator_forward.3} parent=1 // pred_fallthru
      _
    // Predicated region
    $region6: #{res_generator_forward.3} parent=1 // pred_check
      _
    $region7: #{res_generator_forward.3} parent=1 // pred_check_branch
      %12 = sbr.rel (0) target = $region9
    $region8: #{res_generator_forward.3} parent=1 // pred_region
      _
    $region9: #{res_generator_forward.3} parent=1 // pred_fallthru
      _
    // Predicated region
    $region10: #{res_generator_forward.3} parent=1 // pred_check
      _
    $region11: #{res_generator_forward.3} parent=1 // pred_check_branch
      %14 = sbr.rel (0) target = $region13
    $region12: #{res_generator_forward.3} parent=1 // pred_region
      _
    $region13: #{res_generator_forward.3} parent=1 // pred_fallthru
      _
    %v16 = vld [vmem:[%s0] sm:$0xff]
    %v17 = vld [vmem:[%s0 + $0x8] sm:$0xff]
    %v18 = vpack.c.bf16 %v17, %v16
    %v19 = vld [vmem:[%s1] sm:$0xff]
    %v20 = vld [vmem:[%s1 + $0x8] sm:$0xff]
    %v21 = vpack.c.bf16 %v20, %v19
    %v22 = vld [vmem:[%s2] sm:$0xff]
    %v23 = vld [vmem:[%s2 + $0x8] sm:$0xff]
    %24 = vmatprep.subr.bf16.mxu0 0
    %25 = vmatpush1.bf16.xpose.msra.mxu0 %v21
    %26 = vmatprep.subr.bf16.mxu0 0
    %27 = vmatpush1.bf16.xpose.msra.mxu0 0
    %28 = vmatprep.subr.bf16.mxu0 0
    %29 = vmatpush1.bf16.xpose.msra.mxu0 0
    %30 = vmatprep.subr.bf16.mxu0 0
    %31 = vmatpush1.bf16.xpose.msra.mxu0 0
    %32 = vmatprep.subr.bf16.mxu0 0
    %33 = vmatpush1.bf16.xpose.msra.mxu0 0
    %34 = vmatprep.subr.bf16.mxu0 0
    %35 = vmatpush1.bf16.xpose.msra.mxu0 0
    %36 = vmatprep.subr.bf16.mxu0 0
    %37 = vmatpush1.bf16.xpose.msra.mxu0 0
    %38 = vmatprep.subr.bf16.mxu0 0
    %39 = vmatpush1.bf16.xpose.msra.mxu0 0
    %40 = vmatprep.subr.bf16.mxu0 0
    %41 = vmatpush1.bf16.xpose.msra.mxu0 0
    %42 = vmatprep.subr.bf16.mxu0 0
    %43 = vmatpush1.bf16.xpose.msra.mxu0 0
    %44 = vmatprep.subr.bf16.mxu0 0
    %45 = vmatpush1.bf16.xpose.msra.mxu0 0
    %46 = vmatprep.subr.bf16.mxu0 0
    %47 = vmatpush1.bf16.xpose.msra.mxu0 0
    %48 = vmatprep.subr.bf16.mxu0 0
    %49 = vmatpush1.bf16.xpose.msra.mxu0 0
    %50 = vmatprep.subr.bf16.mxu0 0
    %51 = vmatpush1.bf16.xpose.msra.mxu0 0
    %52 = vmatprep.subr.bf16.mxu0 0
    %53 = vmatpush1.bf16.xpose.msra.mxu0 0
    %54 = vmatprep.subr.bf16.mxu0 0
    %55 = vmatpush1.bf16.xpose.msra.mxu0 0
    %56 = vmatprep.mubr.bf16.mxu0 0
    %57 = vmatmul.mubr.bf16.gmra.mrb[0].mxu0 %v18
    %v58 = vpop.f32.mrb[0].mxu0
    %v59 = vadd.f32 %v22, %v58
    %v60 = vpop.f32.mrb[0].mxu0
    %v61 = vpop.f32.mrb[0].mxu0
    %v62 = vadd.f32 %v23, %v61
    %v63 = vpop.f32.mrb[0].mxu0
    %64 = vdwg.mxu0
    %v65 = vxor.u32 %v59, 2147483648
    %v66 = vxor.u32 %v62, 2147483648
    %v67 = vmul.f32 %v65, 1.442695
    %v68 = vpow.pop %v67
    %v69 = vmul.f32 %v66, 1.442695
    %v70 = vpow.pop %v69
    %v71 = vadd.f32 %v68, 1.0
    %v72 = vadd.f32 %v70, 1.0
    %v73 = vrcp.pop %v71
    %v74 = vmul.f32 1.0, %v73
    %v75 = vrcp.pop %v72
    %v76 = vmul.f32 1.0, %v75
    %vm77 = vcmask 130048
    %78 = vst.msk [vmem:[#allocation2] sm:$0xff] %vm77, %v74
    %79 = vst.msk [vmem:[#allocation2 + $0x8] sm:$0xff] %vm77, %v76
    // Predicated region
    $region14: #{res_generator_forward.3} parent=1 // pred_check
      _
    $region15: #{res_generator_forward.3} parent=1 // pred_check_branch
      %81 = sbr.rel (0) target = $region17
    $region16: #{res_generator_forward.3} parent=1 // pred_region
      %s83 = ssub.s32 256, 256
      %84 = vsyncadd [#allocation3], %s83
      %s85 = sshll.u32 [#allocation2], 4
      %s86 = int_to_ptr.vmem [resolvable:$true] %s85
      %91 = dma.vmem_to_hbm [thread:$0]  %s86, 256, %s3, [#allocation3], 128, 128, 8
    $region17: #{res_generator_forward.3} parent=1 // pred_fallthru
      _
    // Predicated region
    $region18: #{res_generator_forward.3} parent=1 // pred_check
      _
    $region19: #{res_generator_forward.3} parent=1 // pred_check_branch
      %93 = sbr.rel (0) target = $region21
    $region20: #{res_generator_forward.3} parent=1 // pred_region
      %94 = dma.done [#allocation3], 256
    $region21: #{res_generator_forward.3} parent=1 // pred_fallthru
      _
    %95 = vsyncpa [#allocation3], 1

</llo_original>
